<compile_context>
chip_gen: v7x
topology: tpu7x:2x2x1
jax: 0.10.0
libtpu: 0.0.40
codegen_flags: <defaults>
</compile_context>

<pallas_src>
import math

import jax
import jax.numpy as jnp
from jax import lax
from jax.experimental import pallas as pl
from jax.experimental.pallas import tpu as pltpu


def _make_autoencoder_kernel(num_layers, act_flags, mxu_dtype):
    """Fused chain of (W @ h + b [+ ReLU]) with batch on the lane axis."""

    def kernel(*refs):
        # refs = (x_ref, w0, b0, w1, b1, ..., w_{L-1}, b_{L-1}, out_ref)
        x_ref = refs[0]          # (tm, in_dim)   natural layout, streamed
        out_ref = refs[-1]       # (out_dim, tm)  batch on lanes, streamed
        prm = refs[1:-1]         # weights (out,in) in mxu_dtype, biases (out,1) f32

        # Layer 0: h = W0 @ x^T expressed as a "contract both minor dims"
        # dot_general (flash-attention q.k^T pattern) -> no transpose of the
        # big activation tile anywhere.
        x_in = x_ref[...].astype(mxu_dtype)                       # (tm, in_dim)
        w0 = prm[0][...]                                          # (out0, in_dim)
        b0 = prm[1][...]                                          # (out0, 1) f32
        h = lax.dot_general(
            w0, x_in, (((1,), (1,)), ((), ())),
            preferred_element_type=jnp.float32) + b0              # (out0, tm) f32
        if act_flags[0]:
            h = jnp.maximum(h, 0.0)

        for i in range(1, num_layers):
            w = prm[2 * i][...]                                   # (out, in)
            b = prm[2 * i + 1][...]                               # (out, 1) f32
            h = jnp.dot(w, h.astype(mxu_dtype),
                        preferred_element_type=jnp.float32) + b   # (out, tm) f32
            if act_flags[i]:
                h = jnp.maximum(h, 0.0)

        out_ref[...] = h.astype(out_ref.dtype)                    # (out_dim, tm)

    return kernel


def _fuse_linear_chain(params, act_flags):
    """Fold W_{i+1}(W_i x + b_i) + b_{i+1} whenever act_flags[i] is False."""
    fused_p, fused_a = [], []
    i, n = 0, len(params)
    while i < n:
        w = jnp.asarray(params[i][0], jnp.float32)
        b = jnp.asarray(params[i][1], jnp.float32)
        act = act_flags[i]
        while (not act) and (i + 1 < n):
            w2 = jnp.asarray(params[i + 1][0], jnp.float32)
            b2 = jnp.asarray(params[i + 1][1], jnp.float32)
            w = jnp.dot(w2, w)            # (out2, in)
            b = jnp.dot(w2, b) + b2       # (out2,)
            act = act_flags[i + 1]
            i += 1
        fused_p.append((w, b))
        fused_a.append(act)
        i += 1
    return fused_p, fused_a


def _round_up(x, m):
    return ((x + m - 1) // m) * m


def _pick_batch_tile(batch):
    """Large tile to amortize per-step overhead; >=2 steps for v7x megacore;
    capped at 4096 so v5e doesn't flip into spill/store-slot bound."""
    if batch <= 256:
        return 128
    return int(min(4096, _round_up((batch + 1) // 2, 128)))


def autoencoder_forward(x, params, act_flags, *, tm=None, mxu_bf16=True):
    """x: (B, in_dim); params[i] = (W(out,in), b(out,)); act_flags: per-layer bool.

    tm (if given) must be a multiple of 128.
    """
    B, in_dim = x.shape

    # Fold adjacent linears with no activation in between (in_model -> encoder[0]).
    fparams, facts = _fuse_linear_chain(params, act_flags)
    num_layers = len(fparams)
    out_dim = fparams[-1][0].shape[0]

    if tm is None:
        tm = _pick_batch_tile(B)
    grid = (pl.cdiv(B, tm),)          # ragged last block handled by Pallas masking

    mxu_dtype = jnp.bfloat16 if mxu_bf16 else jnp.float32

    flat = []
    in_specs = [pl.BlockSpec((tm, in_dim), lambda i: (i, 0))]     # streamed x tile
    for (w, b) in fparams:
        flat.append(w.astype(mxu_dtype))                          # (out, in)
        flat.append(b.reshape(-1, 1).astype(jnp.float32))         # (out, 1)
        # Constant index_map -> weights/biases stay resident in VMEM.
        in_specs.append(pl.BlockSpec(w.shape, lambda i: (0, 0)))
        in_specs.append(pl.BlockSpec((w.shape[0], 1), lambda i: (0, 0)))

    kernel = _make_autoencoder_kernel(num_layers, tuple(facts), mxu_dtype)

    itemsize = x.dtype.itemsize
    flops = 2 * B * sum(w.shape[0] * w.shape[1] for w, _ in fparams)
    bytes_accessed = (
        B * (in_dim + out_dim) * itemsize
        + sum(w.size * jnp.dtype(mxu_dtype).itemsize + b.size * 4
              for w, b in fparams)
    )

    outT = pl.pallas_call(
        kernel,
        out_shape=jax.ShapeDtypeStruct((out_dim, B), x.dtype),
        grid=grid,
        in_specs=in_specs,
        out_specs=pl.BlockSpec((out_dim, tm), lambda i: (0, i)),
        compiler_params=pltpu.CompilerParams(
            dimension_semantics=("parallel",),      # 2 TCs on v7x; no-op v5e/v6e
            vmem_limit_bytes=32 * 1024 * 1024,      # working set is only a few MiB
        ),
        cost_estimate=pl.CostEstimate(
            flops=flops, transcendentals=0, bytes_accessed=int(bytes_accessed)),
    )(x, *flat)

    # TODO(synk): an in-kernel transposed store could remove this small XLA
    # transpose pass (review item 8); kept in the wrapper to avoid the
    # non-128-lane transpose lowering and the masked-store path on v5e.
    return outT.T


def init_autoencoder_params(key, input_dim, hidden_dim, n_layers):
    """Init mirroring nn.Linear's U(-1/sqrt(fan_in), 1/sqrt(fan_in)).

    Returns (params, act_flags) with params[i] = (W(out,in), b(out,)),
    i.e. PyTorch-native weight layout.
    """
    dims = [input_dim, hidden_dim]                       # in_model
    acts = [False]
    for n in range(1, n_layers):                         # encoder
        dims.append(int(1 / n * hidden_dim))
        acts.append(True)
    for n in range(n_layers - 1, 0, -1):                 # decoder
        dims.append(int(1 / n * hidden_dim))
        acts.append(True)
    dims.append(input_dim)                               # out_model
    acts.append(False)

    params = []
    for i in range(len(dims) - 1):
        fan_in, fan_out = dims[i], dims[i + 1]
        key, kw, kb = jax.random.split(key, 3)
        bound = 1.0 / math.sqrt(fan_in)
        w = jax.random.uniform(kw, (fan_out, fan_in), jnp.float32, -bound, bound)
        b = jax.random.uniform(kb, (fan_out,), jnp.float32, -bound, bound)
        params.append((w, b))
    return params, acts


def reference_forward(x, params, act_flags):
    """Pure-JAX f32 reference (matches PyTorch: y = x @ W.T + b)."""
    h = x
    for (w, b), act in zip(params, act_flags):
        h = h @ w.T + b
        if act:
            h = jnp.maximum(h, 0.0)
    return h


if __name__ == "__main__":
    INPUT_DIM = 16
    HIDDEN_DIM = 32
    N_LAYERS = 3
    BATCH = 200          # not a multiple of the tile -> exercises the ragged last block

    key = jax.random.PRNGKey(0)
    key, kx = jax.random.split(key)
    x = jax.random.normal(kx, (BATCH, INPUT_DIM), jnp.float32)

    params, act_flags = init_autoencoder_params(key, INPUT_DIM, HIDDEN_DIM, N_LAYERS)

    # act_flags / shapes are static; params & x are traced.
    fwd = jax.jit(lambda xx, pp: autoencoder_forward(xx, pp, act_flags))
    out = fwd(x, params)            # auto tile -> tm=128, 2 grid steps
    out = jax.block_until_ready(out)

    ref = reference_forward(x, params, act_flags)
    assert out.shape == (BATCH, INPUT_DIM), out.shape
    # bf16 MXU inputs + layer fusion -> relaxed tolerance vs the f32 reference.
    assert jnp.allclose(out, ref, atol=5e-2, rtol=5e-2), (
        f"mismatch vs reference: max abs err {float(jnp.max(jnp.abs(out - ref)))}")

    print("KERNEL_OK")
</pallas_src>

<mosaic_0001>
module attributes {stable_mosaic.version = 11 : i64} {
  func.func @kernel(%arg0: i32, %arg1: memref<128x16xf32, #tpu.memory_space<vmem>>, %arg2: memref<32x16xbf16, #tpu.memory_space<vmem>>, %arg3: memref<32x1xf32, #tpu.memory_space<vmem>>, %arg4: memref<16x32xbf16, #tpu.memory_space<vmem>>, %arg5: memref<16x1xf32, #tpu.memory_space<vmem>>, %arg6: memref<16x16xbf16, #tpu.memory_space<vmem>>, %arg7: memref<16x1xf32, #tpu.memory_space<vmem>>, %arg8: memref<32x16xbf16, #tpu.memory_space<vmem>>, %arg9: memref<32x1xf32, #tpu.memory_space<vmem>>, %arg10: memref<16x32xbf16, #tpu.memory_space<vmem>>, %arg11: memref<16x1xf32, #tpu.memory_space<vmem>>, %arg12: memref<16x128xf32, #tpu.memory_space<vmem>>) attributes {dimension_semantics = [#tpu.dimension_semantics<parallel>], iteration_bounds = array<i64: 2>, scalar_prefetch = 0 : i64, scratch_operands = 0 : i64, tpu.core_type = #tpu.core_type<tc>, window_params = [{transform_indices = @transform_0, window_bounds = array<i64: 128, 16>}, {pipeline_mode = #tpu.pipeline_mode<synchronous>, transform_indices = @transform_1, window_bounds = array<i64: 32, 16>}, {pipeline_mode = #tpu.pipeline_mode<synchronous>, transform_indices = @transform_2, window_bounds = array<i64: 32, 1>}, {pipeline_mode = #tpu.pipeline_mode<synchronous>, transform_indices = @transform_3, window_bounds = array<i64: 16, 32>}, {pipeline_mode = #tpu.pipeline_mode<synchronous>, transform_indices = @transform_4, window_bounds = array<i64: 16, 1>}, {pipeline_mode = #tpu.pipeline_mode<synchronous>, transform_indices = @transform_5, window_bounds = array<i64: 16, 16>}, {pipeline_mode = #tpu.pipeline_mode<synchronous>, transform_indices = @transform_6, window_bounds = array<i64: 16, 1>}, {pipeline_mode = #tpu.pipeline_mode<synchronous>, transform_indices = @transform_7, window_bounds = array<i64: 32, 16>}, {pipeline_mode = #tpu.pipeline_mode<synchronous>, transform_indices = @transform_8, window_bounds = array<i64: 32, 1>}, {pipeline_mode = #tpu.pipeline_mode<synchronous>, transform_indices = @transform_9, window_bounds = array<i64: 16, 32>}, {pipeline_mode = #tpu.pipeline_mode<synchronous>, transform_indices = @transform_10, window_bounds = array<i64: 16, 1>}, {transform_indices = @transform_11, window_bounds = array<i64: 16, 128>}]} {
    %c0 = arith.constant 0 : index
    %c0_0 = arith.constant 0 : index
    %0 = vector.load %arg1[%c0, %c0_0] : memref<128x16xf32, #tpu.memory_space<vmem>>, vector<128x16xf32>
    %1 = arith.truncf %0 : vector<128x16xf32> to vector<128x16xbf16>
    %c0_1 = arith.constant 0 : index
    %c0_2 = arith.constant 0 : index
    %2 = vector.load %arg2[%c0_1, %c0_2] : memref<32x16xbf16, #tpu.memory_space<vmem>>, vector<32x16xbf16>
    %c0_3 = arith.constant 0 : index
    %c0_4 = arith.constant 0 : index
    %3 = vector.load %arg3[%c0_3, %c0_4] : memref<32x1xf32, #tpu.memory_space<vmem>>, vector<32x1xf32>
    %cst = arith.constant dense<0.000000e+00> : vector<32x128xf32>
    %4 = tpu.matmul %2, %1, %cst {dimension_numbers = #tpu.dot_dimension_numbers<[1], [1], [0], [0], [0, 0, 1, 0], [], []>} : vector<32x16xbf16>, vector<128x16xbf16>, vector<32x128xf32> -> vector<32x128xf32>
    %5 = vector.broadcast %3 : vector<32x1xf32> to vector<32x128xf32>
    %6 = arith.addf %4, %5 : vector<32x128xf32>
    %cst_5 = arith.constant 0.000000e+00 : f32
    %7 = vector.broadcast %cst_5 : f32 to vector<32x128xf32>
    %8 = arith.maximumf %6, %7 : vector<32x128xf32>
    %c0_6 = arith.constant 0 : index
    %c0_7 = arith.constant 0 : index
    %9 = vector.load %arg4[%c0_6, %c0_7] : memref<16x32xbf16, #tpu.memory_space<vmem>>, vector<16x32xbf16>
    %c0_8 = arith.constant 0 : index
    %c0_9 = arith.constant 0 : index
    %10 = vector.load %arg5[%c0_8, %c0_9] : memref<16x1xf32, #tpu.memory_space<vmem>>, vector<16x1xf32>
    %11 = arith.truncf %8 : vector<32x128xf32> to vector<32x128xbf16>
    %cst_10 = arith.constant dense<0.000000e+00> : vector<16x128xf32>
    %12 = tpu.matmul %9, %11, %cst_10 {dimension_numbers = #tpu.dot_dimension_numbers<[1], [0], [0], [1], [0, 0, 1, 1], [], []>} : vector<16x32xbf16>, vector<32x128xbf16>, vector<16x128xf32> -> vector<16x128xf32>
    %13 = vector.broadcast %10 : vector<16x1xf32> to vector<16x128xf32>
    %14 = arith.addf %12, %13 : vector<16x128xf32>
    %cst_11 = arith.constant 0.000000e+00 : f32
    %15 = vector.broadcast %cst_11 : f32 to vector<16x128xf32>
    %16 = arith.maximumf %14, %15 : vector<16x128xf32>
    %c0_12 = arith.constant 0 : index
    %c0_13 = arith.constant 0 : index
    %17 = vector.load %arg6[%c0_12, %c0_13] : memref<16x16xbf16, #tpu.memory_space<vmem>>, vector<16x16xbf16>
    %c0_14 = arith.constant 0 : index
    %c0_15 = arith.constant 0 : index
    %18 = vector.load %arg7[%c0_14, %c0_15] : memref<16x1xf32, #tpu.memory_space<vmem>>, vector<16x1xf32>
    %19 = arith.truncf %16 : vector<16x128xf32> to vector<16x128xbf16>
    %cst_16 = arith.constant dense<0.000000e+00> : vector<16x128xf32>
    %20 = tpu.matmul %17, %19, %cst_16 {dimension_numbers = #tpu.dot_dimension_numbers<[1], [0], [0], [1], [0, 0, 1, 1], [], []>} : vector<16x16xbf16>, vector<16x128xbf16>, vector<16x128xf32> -> vector<16x128xf32>
    %21 = vector.broadcast %18 : vector<16x1xf32> to vector<16x128xf32>
    %22 = arith.addf %20, %21 : vector<16x128xf32>
    %cst_17 = arith.constant 0.000000e+00 : f32
    %23 = vector.broadcast %cst_17 : f32 to vector<16x128xf32>
    %24 = arith.maximumf %22, %23 : vector<16x128xf32>
    %c0_18 = arith.constant 0 : index
    %c0_19 = arith.constant 0 : index
    %25 = vector.load %arg8[%c0_18, %c0_19] : memref<32x16xbf16, #tpu.memory_space<vmem>>, vector<32x16xbf16>
    %c0_20 = arith.constant 0 : index
    %c0_21 = arith.constant 0 : index
    %26 = vector.load %arg9[%c0_20, %c0_21] : memref<32x1xf32, #tpu.memory_space<vmem>>, vector<32x1xf32>
    %27 = arith.truncf %24 : vector<16x128xf32> to vector<16x128xbf16>
    %cst_22 = arith.constant dense<0.000000e+00> : vector<32x128xf32>
    %28 = tpu.matmul %25, %27, %cst_22 {dimension_numbers = #tpu.dot_dimension_numbers<[1], [0], [0], [1], [0, 0, 1, 1], [], []>} : vector<32x16xbf16>, vector<16x128xbf16>, vector<32x128xf32> -> vector<32x128xf32>
    %29 = vector.broadcast %26 : vector<32x1xf32> to vector<32x128xf32>
    %30 = arith.addf %28, %29 : vector<32x128xf32>
    %cst_23 = arith.constant 0.000000e+00 : f32
    %31 = vector.broadcast %cst_23 : f32 to vector<32x128xf32>
    %32 = arith.maximumf %30, %31 : vector<32x128xf32>
    %c0_24 = arith.constant 0 : index
    %c0_25 = arith.constant 0 : index
    %33 = vector.load %arg10[%c0_24, %c0_25] : memref<16x32xbf16, #tpu.memory_space<vmem>>, vector<16x32xbf16>
    %c0_26 = arith.constant 0 : index
    %c0_27 = arith.constant 0 : index
    %34 = vector.load %arg11[%c0_26, %c0_27] : memref<16x1xf32, #tpu.memory_space<vmem>>, vector<16x1xf32>
    %35 = arith.truncf %32 : vector<32x128xf32> to vector<32x128xbf16>
    %cst_28 = arith.constant dense<0.000000e+00> : vector<16x128xf32>
    %36 = tpu.matmul %33, %35, %cst_28 {dimension_numbers = #tpu.dot_dimension_numbers<[1], [0], [0], [1], [0, 0, 1, 1], [], []>} : vector<16x32xbf16>, vector<32x128xbf16>, vector<16x128xf32> -> vector<16x128xf32>
    %37 = vector.broadcast %34 : vector<16x1xf32> to vector<16x128xf32>
    %38 = arith.addf %36, %37 : vector<16x128xf32>
    %c0_29 = arith.constant 0 : index
    %c0_30 = arith.constant 0 : index
    %39 = vector.load %arg12[%c0_29, %c0_30] : memref<16x128xf32, #tpu.memory_space<vmem>>, vector<16x128xf32>
    tpu.vector_store %arg12[%c0_29, %c0_30], %38 {strides = array<i32>} : memref<16x128xf32, #tpu.memory_space<vmem>>, vector<16x128xf32>,
    return
  }
  func.func @transform_0(%arg0: i32) -> (i32, i32) {
    %c0_i32 = arith.constant 0 : i32
    %c0_i32_0 = arith.constant 0 : i32
    return %arg0, %c0_i32 : i32, i32
  }
  func.func @transform_1(%arg0: i32) -> (i32, i32) {
    %c0_i32 = arith.constant 0 : i32
    %c0_i32_0 = arith.constant 0 : i32
    %c0_i32_1 = arith.constant 0 : i32
    return %c0_i32, %c0_i32_0 : i32, i32
  }
  func.func @transform_2(%arg0: i32) -> (i32, i32) {
    %c0_i32 = arith.constant 0 : i32
    %c0_i32_0 = arith.constant 0 : i32
    %c0_i32_1 = arith.constant 0 : i32
    return %c0_i32, %c0_i32_0 : i32, i32
  }
  func.func @transform_3(%arg0: i32) -> (i32, i32) {
    %c0_i32 = arith.constant 0 : i32
    %c0_i32_0 = arith.constant 0 : i32
    %c0_i32_1 = arith.constant 0 : i32
    return %c0_i32, %c0_i32_0 : i32, i32
  }
  func.func @transform_4(%arg0: i32) -> (i32, i32) {
    %c0_i32 = arith.constant 0 : i32
    %c0_i32_0 = arith.constant 0 : i32
    %c0_i32_1 = arith.constant 0 : i32
    return %c0_i32, %c0_i32_0 : i32, i32
  }
  func.func @transform_5(%arg0: i32) -> (i32, i32) {
    %c0_i32 = arith.constant 0 : i32
    %c0_i32_0 = arith.constant 0 : i32
    %c0_i32_1 = arith.constant 0 : i32
    return %c0_i32, %c0_i32_0 : i32, i32
  }
  func.func @transform_6(%arg0: i32) -> (i32, i32) {
    %c0_i32 = arith.constant 0 : i32
    %c0_i32_0 = arith.constant 0 : i32
    %c0_i32_1 = arith.constant 0 : i32
    return %c0_i32, %c0_i32_0 : i32, i32
  }
  func.func @transform_7(%arg0: i32) -> (i32, i32) {
    %c0_i32 = arith.constant 0 : i32
    %c0_i32_0 = arith.constant 0 : i32
    %c0_i32_1 = arith.constant 0 : i32
    return %c0_i32, %c0_i32_0 : i32, i32
  }
  func.func @transform_8(%arg0: i32) -> (i32, i32) {
    %c0_i32 = arith.constant 0 : i32
    %c0_i32_0 = arith.constant 0 : i32
    %c0_i32_1 = arith.constant 0 : i32
    return %c0_i32, %c0_i32_0 : i32, i32
  }
  func.func @transform_9(%arg0: i32) -> (i32, i32) {
    %c0_i32 = arith.constant 0 : i32
    %c0_i32_0 = arith.constant 0 : i32
    %c0_i32_1 = arith.constant 0 : i32
    return %c0_i32, %c0_i32_0 : i32, i32
  }
  func.func @transform_10(%arg0: i32) -> (i32, i32) {
    %c0_i32 = arith.constant 0 : i32
    %c0_i32_0 = arith.constant 0 : i32
    %c0_i32_1 = arith.constant 0 : i32
    return %c0_i32, %c0_i32_0 : i32, i32
  }
  func.func @transform_11(%arg0: i32) -> (i32, i32) {
    %c0_i32 = arith.constant 0 : i32
    %c0_i32_0 = arith.constant 0 : i32
    return %c0_i32, %arg0 : i32, i32
  }
}

</mosaic_0001>

<llo_original>
// kernel: _lambda_.1
$region0: #{_lambda_.1}
  #allocation0 [shape = 'u32[]', space=smem, size = 0x4, offset = 0x4, fixed_abs, tag = 'smem constant byte address 0x4 - core index']
  #allocation1 [shape = 'u32[144,128]{1,0:T(1,128)}', space=vmem, size = 0x12000, scoped, tag = 'internal scratch']
  %s0 = inlined_call_operand.vmem [shape: f32[200,16], index: 0, kind: input, shape index: {}]
  %s1 = inlined_call_operand.vmem [shape: bf16[32,16], index: 1, kind: input, shape index: {}]
  %s2 = inlined_call_operand.vmem [shape: f32[32,1], index: 2, kind: input, shape index: {}]
  %s3 = inlined_call_operand.vmem [shape: bf16[16,32], index: 3, kind: input, shape index: {}]
  %s4 = inlined_call_operand.vmem [shape: f32[16,1], index: 4, kind: input, shape index: {}]
  %s5 = inlined_call_operand.vmem [shape: bf16[16,16], index: 5, kind: input, shape index: {}]
  %s6 = inlined_call_operand.vmem [shape: f32[16,1], index: 6, kind: input, shape index: {}]
  %s7 = inlined_call_operand.vmem [shape: bf16[32,16], index: 7, kind: input, shape index: {}]
  %s8 = inlined_call_operand.vmem [shape: f32[32,1], index: 8, kind: input, shape index: {}]
  %s9 = inlined_call_operand.vmem [shape: bf16[16,32], index: 9, kind: input, shape index: {}]
  %s10 = inlined_call_operand.vmem [shape: f32[16,1], index: 10, kind: input, shape index: {}]
  %s11 = inlined_call_operand.hbm [shape: f32[16,200], index: 11, kind: output, shape index: {}]
  %s12 = sld [smem:[#allocation0]]
  $region77: #{_lambda_.1} parent=0
    _
  %s14 = ssub.s32 1, %s12
  %s15 = scalar_select 0, %s14, %s12
  $region1: #{_lambda_.1} parent=0
    #allocation2 [shape = 'u8[16384]{0}', space=vmem, size = 0x4000, scoped, tag = 'output window, operand 0']
    #allocation3 [shape = 's32[2]{0}', space=sflag, size = 0x8, scoped, tag = 'scoped memory for _lambda_.1']
    %16 = vsyncpa [#allocation3], 0
    %s17 = scalar_lea.sflag [#allocation3], 1
    %18 = vsyncpa %s17, 0
    loop: start=0, step=1, limit=4
    $region2: #{_lambda_.1} parent=1 // loop_pre_header
      _
    $region3: #{_lambda_.1} parent=1 // loop_header
      %s20 = sphi 0, %s24
      %p21 = scmp.ge.s32.totalorder %s20, 4
      %s30 = sphi 0, %s32
      %s33 = sphi 0, %s30
      %s34 = sphi 0, %s33
      %s50 = sphi 0, %s34
      %s54 = sphi 0, %s54
      %s56 = sphi 0, %s54
      %s57 = sphi 0, %s56
      %s71 = sphi 0, %s57
      %s75 = sphi 0, %s75
      %s77 = sphi 0, %s75
      %s78 = sphi 0, %s77
      %s92 = sphi 0, %s78
      %s96 = sphi 0, %s96
      %s98 = sphi 0, %s96
      %s99 = sphi 0, %s98
      %s113 = sphi 0, %s99
      %s117 = sphi 0, %s117
      %s119 = sphi 0, %s117
      %s120 = sphi 0, %s119
      %s134 = sphi 0, %s120
      %s138 = sphi 0, %s138
      %s140 = sphi 0, %s138
      %s141 = sphi 0, %s140
      %s155 = sphi 0, %s141
      %s159 = sphi 0, %s159
      %s161 = sphi 0, %s159
      %s162 = sphi 0, %s161
      %s176 = sphi 0, %s162
      %s180 = sphi 0, %s180
      %s182 = sphi 0, %s180
      %s183 = sphi 0, %s182
      %s197 = sphi 0, %s183
      %s201 = sphi 0, %s201
      %s203 = sphi 0, %s201
      %s204 = sphi 0, %s203
      %s218 = sphi 0, %s204
      %s222 = sphi 0, %s222
      %s224 = sphi 0, %s222
      %s225 = sphi 0, %s224
      %s239 = sphi 0, %s225
      %s243 = sphi 0, %s243
      %s245 = sphi 0, %s243
      %s246 = sphi 0, %s245
      %s260 = sphi 0, %s246
      %s266 = sphi 0, %s268
      %s269 = sphi 0, %s266
      %s270 = sphi 0, %s269
      %s286 = sphi 0, %s270
    $region4: #{_lambda_.1} parent=1 // loop_header_branch
      %23 = sbr.rel (%p21) target = $region8
    $region5: #{_lambda_.1} parent=1 // loop_body
      %s25 = ssub.s32 %s20, 1
      %s26 = ssub.s32 %s20, 2
      %s27 = sadd.s32 %s20, 1
      %s28 = ssub.s32 %s20, %s27
      %p29 = scmp.eq.s32.totalorder %s28, 0
      %s31 = sadd.s32 %s30, 1
      %s32 = scalar_select %p29, %s30, %s31
      %p35 = pneg %p29
      %p36 = scmp.eq.s32.totalorder %s20, 1
      %p37 = por %p35, %p36
      %p38 = scmp.ne.s32.totalorder %s30, %s33
      %p39 = scmp.eq.s32.totalorder %s20, 0
      %p40 = por %p38, %p39
      %p41 = scmp.ne.s32.totalorder %s30, %s33
      %p42 = scmp.eq.s32.totalorder %s25, 1
      %p43 = por %p41, %p42
      %p44 = scmp.ne.s32.totalorder %s33, %s34
      %p45 = scmp.eq.s32.totalorder %s25, 0
      %p46 = por %p44, %p45
      %p47 = scmp.ne.s32.totalorder %s33, %s34
      %p48 = scmp.eq.s32.totalorder %s26, 1
      %p49 = por %p47, %p48
      %p51 = scmp.ne.s32.totalorder %s34, %s50
      %p52 = scmp.eq.s32.totalorder %s26, 0
      %p53 = por %p51, %p52
      %s55 = sadd.s32 %s54, 1
      %p58 = scmp.eq.s32.totalorder %s20, 1
      %p59 = scmp.ne.s32.totalorder %s54, %s56
      %p60 = scmp.eq.s32.totalorder %s20, 0
      %p61 = por %p59, %p60
      %p62 = scmp.ne.s32.totalorder %s54, %s56
      %p63 = scmp.eq.s32.totalorder %s25, 1
      %p64 = por %p62, %p63
      %p65 = scmp.ne.s32.totalorder %s56, %s57
      %p66 = scmp.eq.s32.totalorder %s25, 0
      %p67 = por %p65, %p66
      %p68 = scmp.ne.s32.totalorder %s56, %s57
      %p69 = scmp.eq.s32.totalorder %s26, 1
      %p70 = por %p68, %p69
      %p72 = scmp.ne.s32.totalorder %s57, %s71
      %p73 = scmp.eq.s32.totalorder %s26, 0
      %p74 = por %p72, %p73
      %s76 = sadd.s32 %s75, 1
      %p79 = scmp.eq.s32.totalorder %s20, 1
      %p80 = scmp.ne.s32.totalorder %s75, %s77
      %p81 = scmp.eq.s32.totalorder %s20, 0
      %p82 = por %p80, %p81
      %p83 = scmp.ne.s32.totalorder %s75, %s77
      %p84 = scmp.eq.s32.totalorder %s25, 1
      %p85 = por %p83, %p84
      %p86 = scmp.ne.s32.totalorder %s77, %s78
      %p87 = scmp.eq.s32.totalorder %s25, 0
      %p88 = por %p86, %p87
      %p89 = scmp.ne.s32.totalorder %s77, %s78
      %p90 = scmp.eq.s32.totalorder %s26, 1
      %p91 = por %p89, %p90
      %p93 = scmp.ne.s32.totalorder %s78, %s92
      %p94 = scmp.eq.s32.totalorder %s26, 0
      %p95 = por %p93, %p94
      %s97 = sadd.s32 %s96, 1
      %p100 = scmp.eq.s32.totalorder %s20, 1
      %p101 = scmp.ne.s32.totalorder %s96, %s98
      %p102 = scmp.eq.s32.totalorder %s20, 0
      %p103 = por %p101, %p102
      %p104 = scmp.ne.s32.totalorder %s96, %s98
      %p105 = scmp.eq.s32.totalorder %s25, 1
      %p106 = por %p104, %p105
      %p107 = scmp.ne.s32.totalorder %s98, %s99
      %p108 = scmp.eq.s32.totalorder %s25, 0
      %p109 = por %p107, %p108
      %p110 = scmp.ne.s32.totalorder %s98, %s99
      %p111 = scmp.eq.s32.totalorder %s26, 1
      %p112 = por %p110, %p111
      %p114 = scmp.ne.s32.totalorder %s99, %s113
      %p115 = scmp.eq.s32.totalorder %s26, 0
      %p116 = por %p114, %p115
      %s118 = sadd.s32 %s117, 1
      %p121 = scmp.eq.s32.totalorder %s20, 1
      %p122 = scmp.ne.s32.totalorder %s117, %s119
      %p123 = scmp.eq.s32.totalorder %s20, 0
      %p124 = por %p122, %p123
      %p125 = scmp.ne.s32.totalorder %s117, %s119
      %p126 = scmp.eq.s32.totalorder %s25, 1
      %p127 = por %p125, %p126
      %p128 = scmp.ne.s32.totalorder %s119, %s120
      %p129 = scmp.eq.s32.totalorder %s25, 0
      %p130 = por %p128, %p129
      %p131 = scmp.ne.s32.totalorder %s119, %s120
      %p132 = scmp.eq.s32.totalorder %s26, 1
      %p133 = por %p131, %p132
      %p135 = scmp.ne.s32.totalorder %s120, %s134
      %p136 = scmp.eq.s32.totalorder %s26, 0
      %p137 = por %p135, %p136
      %s139 = sadd.s32 %s138, 1
      %p142 = scmp.eq.s32.totalorder %s20, 1
      %p143 = scmp.ne.s32.totalorder %s138, %s140
      %p144 = scmp.eq.s32.totalorder %s20, 0
      %p145 = por %p143, %p144
      %p146 = scmp.ne.s32.totalorder %s138, %s140
      %p147 = scmp.eq.s32.totalorder %s25, 1
      %p148 = por %p146, %p147
      %p149 = scmp.ne.s32.totalorder %s140, %s141
      %p150 = scmp.eq.s32.totalorder %s25, 0
      %p151 = por %p149, %p150
      %p152 = scmp.ne.s32.totalorder %s140, %s141
      %p153 = scmp.eq.s32.totalorder %s26, 1
      %p154 = por %p152, %p153
      %p156 = scmp.ne.s32.totalorder %s141, %s155
      %p157 = scmp.eq.s32.totalorder %s26, 0
      %p158 = por %p156, %p157
      %s160 = sadd.s32 %s159, 1
      %p163 = scmp.eq.s32.totalorder %s20, 1
      %p164 = scmp.ne.s32.totalorder %s159, %s161
      %p165 = scmp.eq.s32.totalorder %s20, 0
      %p166 = por %p164, %p165
      %p167 = scmp.ne.s32.totalorder %s159, %s161
      %p168 = scmp.eq.s32.totalorder %s25, 1
      %p169 = por %p167, %p168
      %p170 = scmp.ne.s32.totalorder %s161, %s162
      %p171 = scmp.eq.s32.totalorder %s25, 0
      %p172 = por %p170, %p171
      %p173 = scmp.ne.s32.totalorder %s161, %s162
      %p174 = scmp.eq.s32.totalorder %s26, 1
      %p175 = por %p173, %p174
      %p177 = scmp.ne.s32.totalorder %s162, %s176
      %p178 = scmp.eq.s32.totalorder %s26, 0
      %p179 = por %p177, %p178
      %s181 = sadd.s32 %s180, 1
      %p184 = scmp.eq.s32.totalorder %s20, 1
      %p185 = scmp.ne.s32.totalorder %s180, %s182
      %p186 = scmp.eq.s32.totalorder %s20, 0
      %p187 = por %p185, %p186
      %p188 = scmp.ne.s32.totalorder %s180, %s182
      %p189 = scmp.eq.s32.totalorder %s25, 1
      %p190 = por %p188, %p189
      %p191 = scmp.ne.s32.totalorder %s182, %s183
      %p192 = scmp.eq.s32.totalorder %s25, 0
      %p193 = por %p191, %p192
      %p194 = scmp.ne.s32.totalorder %s182, %s183
      %p195 = scmp.eq.s32.totalorder %s26, 1
      %p196 = por %p194, %p195
      %p198 = scmp.ne.s32.totalorder %s183, %s197
      %p199 = scmp.eq.s32.totalorder %s26, 0
      %p200 = por %p198, %p199
      %s202 = sadd.s32 %s201, 1
      %p205 = scmp.eq.s32.totalorder %s20, 1
      %p206 = scmp.ne.s32.totalorder %s201, %s203
      %p207 = scmp.eq.s32.totalorder %s20, 0
      %p208 = por %p206, %p207
      %p209 = scmp.ne.s32.totalorder %s201, %s203
      %p210 = scmp.eq.s32.totalorder %s25, 1
      %p211 = por %p209, %p210
      %p212 = scmp.ne.s32.totalorder %s203, %s204
      %p213 = scmp.eq.s32.totalorder %s25, 0
      %p214 = por %p212, %p213
      %p215 = scmp.ne.s32.totalorder %s203, %s204
      %p216 = scmp.eq.s32.totalorder %s26, 1
      %p217 = por %p215, %p216
      %p219 = scmp.ne.s32.totalorder %s204, %s218
      %p220 = scmp.eq.s32.totalorder %s26, 0
      %p221 = por %p219, %p220
      %s223 = sadd.s32 %s222, 1
      %p226 = scmp.eq.s32.totalorder %s20, 1
      %p227 = scmp.ne.s32.totalorder %s222, %s224
      %p228 = scmp.eq.s32.totalorder %s20, 0
      %p229 = por %p227, %p228
      %p230 = scmp.ne.s32.totalorder %s222, %s224
      %p231 = scmp.eq.s32.totalorder %s25, 1
      %p232 = por %p230, %p231
      %p233 = scmp.ne.s32.totalorder %s224, %s225
      %p234 = scmp.eq.s32.totalorder %s25, 0
      %p235 = por %p233, %p234
      %p236 = scmp.ne.s32.totalorder %s224, %s225
      %p237 = scmp.eq.s32.totalorder %s26, 1
      %p238 = por %p236, %p237
      %p240 = scmp.ne.s32.totalorder %s225, %s239
      %p241 = scmp.eq.s32.totalorder %s26, 0
      %p242 = por %p240, %p241
      %s244 = sadd.s32 %s243, 1
      %p247 = scmp.eq.s32.totalorder %s20, 1
      %p248 = scmp.ne.s32.totalorder %s243, %s245
      %p249 = scmp.eq.s32.totalorder %s20, 0
      %p250 = por %p248, %p249
      %p251 = scmp.ne.s32.totalorder %s243, %s245
      %p252 = scmp.eq.s32.totalorder %s25, 1
      %p253 = por %p251, %p252
      %p254 = scmp.ne.s32.totalorder %s245, %s246
      %p255 = scmp.eq.s32.totalorder %s25, 0
      %p256 = por %p254, %p255
      %p257 = scmp.ne.s32.totalorder %s245, %s246
      %p258 = scmp.eq.s32.totalorder %s26, 1
      %p259 = por %p257, %p258
      %p261 = scmp.ne.s32.totalorder %s246, %s260
      %p262 = scmp.eq.s32.totalorder %s26, 0
      %p263 = por %p261, %p262
      %s264 = ssub.s32 %s20, %s27
      %p265 = scmp.eq.s32.totalorder %s264, 0
      %s267 = sadd.s32 %s266, 1
      %s268 = scalar_select %p265, %s266, %s267
      %p271 = pneg %p265
      %p272 = scmp.eq.s32.totalorder %s20, 1
      %p273 = por %p271, %p272
      %p274 = scmp.ne.s32.totalorder %s266, %s269
      %p275 = scmp.eq.s32.totalorder %s20, 0
      %p276 = por %p274, %p275
      %p277 = scmp.ne.s32.totalorder %s266, %s269
      %p278 = scmp.eq.s32.totalorder %s25, 1
      %p279 = por %p277, %p278
      %p280 = scmp.ne.s32.totalorder %s269, %s270
      %p281 = scmp.eq.s32.totalorder %s25, 0
      %p282 = por %p280, %p281
      %p283 = scmp.ne.s32.totalorder %s269, %s270
      %p284 = scmp.eq.s32.totalorder %s26, 1
      %p285 = por %p283, %p284
      %p287 = scmp.ne.s32.totalorder %s270, %s286
      %p288 = scmp.eq.s32.totalorder %s26, 0
      %p289 = por %p287, %p288
      %p290 = scmp.le.s32.totalorder 1, %s20
      %p291 = scmp.lt.s32.totalorder %s20, 3
      %p292 = pnand %p290, %p291
      %p293 = pneg %p292
      // Predicated region
      $region9: #{_lambda_.1} parent=5 // pred_check
        _
      $region10: #{_lambda_.1} parent=5 // pred_check_branch
        %295 = sbr.rel (%p292) target = $region12
      $region11: #{_lambda_.1} parent=5 // pred_region
        %s296 = ssub.s32 %s20, 1
        // Predicated region
        $region13: #{_lambda_.1} parent=11 // pred_check
          %p297 = pneg %p67
        $region14: #{_lambda_.1} parent=11 // pred_check_branch
          %299 = sbr.rel (%p297) target = $region16
        $region15: #{_lambda_.1} parent=11 // pred_region
          _
        $region16: #{_lambda_.1} parent=11 // pred_fallthru
          _
        // Predicated region
        $region17: #{_lambda_.1} parent=11 // pred_check
          %p300 = pneg %p88
        $region18: #{_lambda_.1} parent=11 // pred_check_branch
          %302 = sbr.rel (%p300) target = $region20
        $region19: #{_lambda_.1} parent=11 // pred_region
          _
        $region20: #{_lambda_.1} parent=11 // pred_fallthru
          _
        // Predicated region
        $region21: #{_lambda_.1} parent=11 // pred_check
          %p303 = pneg %p109
        $region22: #{_lambda_.1} parent=11 // pred_check_branch
          %305 = sbr.rel (%p303) target = $region24
        $region23: #{_lambda_.1} parent=11 // pred_region
          _
        $region24: #{_lambda_.1} parent=11 // pred_fallthru
          _
        // Predicated region
        $region25: #{_lambda_.1} parent=11 // pred_check
          %p306 = pneg %p130
        $region26: #{_lambda_.1} parent=11 // pred_check_branch
          %308 = sbr.rel (%p306) target = $region28
        $region27: #{_lambda_.1} parent=11 // pred_region
          _
        $region28: #{_lambda_.1} parent=11 // pred_fallthru
          _
        // Predicated region
        $region29: #{_lambda_.1} parent=11 // pred_check
          %p309 = pneg %p151
        $region30: #{_lambda_.1} parent=11 // pred_check_branch
          %311 = sbr.rel (%p309) target = $region32
        $region31: #{_lambda_.1} parent=11 // pred_region
          _
        $region32: #{_lambda_.1} parent=11 // pred_fallthru
          _
        // Predicated region
        $region33: #{_lambda_.1} parent=11 // pred_check
          %p312 = pneg %p172
        $region34: #{_lambda_.1} parent=11 // pred_check_branch
          %314 = sbr.rel (%p312) target = $region36
        $region35: #{_lambda_.1} parent=11 // pred_region
          _
        $region36: #{_lambda_.1} parent=11 // pred_fallthru
          _
        // Predicated region
        $region37: #{_lambda_.1} parent=11 // pred_check
          %p315 = pneg %p193
        $region38: #{_lambda_.1} parent=11 // pred_check_branch
          %317 = sbr.rel (%p315) target = $region40
        $region39: #{_lambda_.1} parent=11 // pred_region
          _
        $region40: #{_lambda_.1} parent=11 // pred_fallthru
          _
        // Predicated region
        $region41: #{_lambda_.1} parent=11 // pred_check
          %p318 = pneg %p214
        $region42: #{_lambda_.1} parent=11 // pred_check_branch
          %320 = sbr.rel (%p318) target = $region44
        $region43: #{_lambda_.1} parent=11 // pred_region
          _
        $region44: #{_lambda_.1} parent=11 // pred_fallthru
          _
        // Predicated region
        $region45: #{_lambda_.1} parent=11 // pred_check
          %p321 = pneg %p235
        $region46: #{_lambda_.1} parent=11 // pred_check_branch
          %323 = sbr.rel (%p321) target = $region48
        $region47: #{_lambda_.1} parent=11 // pred_region
          _
        $region48: #{_lambda_.1} parent=11 // pred_fallthru
          _
        // Predicated region
        $region49: #{_lambda_.1} parent=11 // pred_check
          %p324 = pneg %p256
        $region50: #{_lambda_.1} parent=11 // pred_check_branch
          %326 = sbr.rel (%p324) target = $region52
        $region51: #{_lambda_.1} parent=11 // pred_region
          _
        $region52: #{_lambda_.1} parent=11 // pred_fallthru
          _
      $region12: #{_lambda_.1} parent=5 // pred_fallthru
        _
      %p327 = scmp.lt.s32.totalorder %s20, 2
      // Predicated region
      $region53: #{_lambda_.1} parent=5 // pred_check
        %p328 = pneg %p327
      $region54: #{_lambda_.1} parent=5 // pred_check_branch
        %330 = sbr.rel (%p328) target = $region56
      $region55: #{_lambda_.1} parent=5 // pred_region
        // Predicated region
        $region57: #{_lambda_.1} parent=55 // pred_check
          %p331 = pneg %p40
        $region58: #{_lambda_.1} parent=55 // pred_check_branch
          %333 = sbr.rel (%p331) target = $region60
        $region59: #{_lambda_.1} parent=55 // pred_region
          %s334 = smul.u32 16, %s20
          %s335 = ssub.s32 25, %s334
          %p336 = scmp.lt.s32.totalorder %s335, 16
          %s337 = scalar_select %p336, %s335, 16
          %s338 = smul.u32 128, %s337
          %p339 = scmp.lt.s32.totalorder %s334, 24
          %s340 = scalar_select %p339, %s334, 24
          %s341 = smul.addr %s340, 8
          %s342 = scalar_lea.vmem %s0, %s341
          %s343 = smul.u32 16, %s20
          %s344 = ssub.s32 25, %s343
          %p345 = scmp.lt.s32.totalorder %s344, 16
          %s346 = scalar_select %p345, %s344, 16
          %s347 = smul.u32 128, %s346
        $region60: #{_lambda_.1} parent=55 // pred_fallthru
          _
      $region56: #{_lambda_.1} parent=5 // pred_fallthru
        _
      %p348 = scmp.le.s32.totalorder 1, %s20
      %p349 = scmp.lt.s32.totalorder %s20, 3
      %p350 = pnand %p348, %p349
      %p351 = pneg %p350
      // Predicated region
      $region61: #{_lambda_.1} parent=5 // pred_check
        _
      $region62: #{_lambda_.1} parent=5 // pred_check_branch
        %353 = sbr.rel (%p350) target = $region64
      $region63: #{_lambda_.1} parent=5 // pred_region
        %s354 = ssub.s32 %s20, 1
        %s355 = smul.u32 16, %s25
        %s356 = ssub.s32 25, %s355
        %p357 = scmp.lt.s32.totalorder %s356, 16
        %s358 = scalar_select %p357, %s356, 16
        %s359 = smul.u32 128, %s358
        %p360 = scmp.lt.s32.totalorder %s355, 24
        %s361 = scalar_select %p360, %s355, 24
        %s362 = smul.addr %s361, 8
        %s363 = scalar_lea.vmem %s0, %s362
        %p364 = pneg %p46
        %p365 = pneg %p43
        %p366 = pneg %p67
        %p367 = pneg %p64
        %p368 = pneg %p88
        %p369 = pneg %p85
        %p370 = pneg %p109
        %p371 = pneg %p106
        %p372 = pneg %p130
        %p373 = pneg %p127
        %p374 = pneg %p151
        %p375 = pneg %p148
        %p376 = pneg %p172
        %p377 = pneg %p169
        %p378 = pneg %p193
        %p379 = pneg %p190
        %p380 = pneg %p214
        %p381 = pneg %p211
        %p382 = pneg %p235
        %p383 = pneg %p232
        %p384 = pneg %p256
        %p385 = pneg %p253
        %p386 = pneg %p282
        %p387 = pneg %p279
        %s388 = sand.u32 %s269, 1
        %s389 = scalar_lea.sflag [#allocation3], %s388
        %s390 = sand.u32 %s269, 1
        %s391 = smul.addr %s390, 16
        %s392 = scalar_lea.vmem [#allocation2], %s391
        %s393 = smul.u32 16, %s25
        %s394 = ssub.s32 25, %s393
        %p395 = scmp.lt.s32.totalorder %s394, 16
        %s396 = scalar_select %p395, %s394, 16
        %s397 = smul.u32 128, %s396
        %p398 = scmp.lt.s32.totalorder %s393, 24
        %s399 = scalar_select %p398, %s393, 24
        %s400 = smul.addr %s399, 8
        %s401 = scalar_lea.vmem %s0, %s400
        %s402 = smul.u32 16, %s25
        %s403 = ssub.s32 25, %s402
        %p404 = scmp.lt.s32.totalorder %s403, 16
        %s405 = scalar_select %p404, %s403, 16
        %s406 = smul.u32 128, %s405
        %v408 = vld [vmem:[%s401] sm:$0xff]
        %v409 = vld [vmem:[%s401 + $0x8] sm:$0xff]
        %v410 = vld [vmem:[%s401 + $0x10] sm:$0xff]
        %v411 = vld [vmem:[%s401 + $0x18] sm:$0xff]
        %v412 = vld [vmem:[%s401 + $0x20] sm:$0xff]
        %v413 = vld [vmem:[%s401 + $0x28] sm:$0xff]
        %v414 = vld [vmem:[%s401 + $0x30] sm:$0xff]
        %v415 = vld [vmem:[%s401 + $0x38] sm:$0xff]
        %v416 = vld [vmem:[%s401 + $0x40] sm:$0xff]
        %v417 = vld [vmem:[%s401 + $0x48] sm:$0xff]
        %v418 = vld [vmem:[%s401 + $0x50] sm:$0xff]
        %v419 = vld [vmem:[%s401 + $0x58] sm:$0xff]
        %v420 = vld [vmem:[%s401 + $0x60] sm:$0xff]
        %v421 = vld [vmem:[%s401 + $0x68] sm:$0xff]
        %v422 = vld [vmem:[%s401 + $0x70] sm:$0xff]
        %v423 = vld [vmem:[%s401 + $0x78] sm:$0xff]
        %v424 = vpack.c.bf16 %v409, %v408
        %v425 = vpack.c.bf16 %v411, %v410
        %v426 = vpack.c.bf16 %v413, %v412
        %v427 = vpack.c.bf16 %v415, %v414
        %v428 = vpack.c.bf16 %v417, %v416
        %v429 = vpack.c.bf16 %v419, %v418
        %v430 = vpack.c.bf16 %v421, %v420
        %v431 = vpack.c.bf16 %v423, %v422
        %v432 = vld [vmem:[%s1] sm:$0xf]
        %v433 = vld [vmem:[%s1 + $0x4] sm:$0xf]
        %v434 = vld [vmem:[%s1 + $0x8] sm:$0xf]
        %v435 = vld [vmem:[%s1 + $0xc] sm:$0xf]
        %v436 = vld [vmem:[%s2] sm:$0xff]
        %v437 = vld [vmem:[%s2 + $0x8] sm:$0xff]
        %v438 = vld [vmem:[%s2 + $0x10] sm:$0xff]
        %v439 = vld [vmem:[%s2 + $0x18] sm:$0xff]
        %441 = vset.pattern.permute.xlu0 0
        %442 = vperm.xlu0 %441, %v436
        %v443 = vpop.permute.xlu0 %442
        %446 = vset.pattern.permute.xlu0 0
        %447 = vperm.xlu0 %446, %v437
        %v448 = vpop.permute.xlu0 %447
        %451 = vset.pattern.permute.xlu0 0
        %452 = vperm.xlu0 %451, %v438
        %v453 = vpop.permute.xlu0 %452
        %456 = vset.pattern.permute.xlu0 0
        %457 = vperm.xlu0 %456, %v439
        %v458 = vpop.permute.xlu0 %457
        %v464 = vunpack.c.l.b16 %v432
        %v465 = vunpack.c.l.b16 %v433
        %v466 = vunpack.c.l.b16 %v434
        %v467 = vunpack.c.l.b16 %v435
        %v468 = vpack.c.b16 %v465, %v464
        %v469 = vpack.c.b16 %v467, %v466
        %vm470 = vcmask 130048
        %v472 = vsel %vm470, %v468, 0
        %v475 = vsel %vm470, %v469, 0
        %v478 = vsel %vm470, %v424, 0
        %v481 = vsel %vm470, %v425, 0
        %v484 = vsel %vm470, %v426, 0
        %v487 = vsel %vm470, %v427, 0
        %v490 = vsel %vm470, %v428, 0
        %v493 = vsel %vm470, %v429, 0
        %v496 = vsel %vm470, %v430, 0
        %v499 = vsel %vm470, %v431, 0
        %501 = vmatprep.subr.bf16.mxu0 0
        %502 = vmatpush1.bf16.xpose.msra.mxu0 %v478
        %503 = vmatprep.subr.bf16.mxu0 0
        %504 = vmatpush1.bf16.xpose.msra.mxu0 %v481
        %505 = vmatprep.subr.bf16.mxu0 0
        %506 = vmatpush1.bf16.xpose.msra.mxu0 %v484
        %507 = vmatprep.subr.bf16.mxu0 0
        %508 = vmatpush1.bf16.xpose.msra.mxu0 %v487
        %509 = vmatprep.subr.bf16.mxu0 0
        %510 = vmatpush1.bf16.xpose.msra.mxu0 %v490
        %511 = vmatprep.subr.bf16.mxu0 0
        %512 = vmatpush1.bf16.xpose.msra.mxu0 %v493
        %513 = vmatprep.subr.bf16.mxu0 0
        %514 = vmatpush1.bf16.xpose.msra.mxu0 %v496
        %515 = vmatprep.subr.bf16.mxu0 0
        %516 = vmatpush1.bf16.xpose.msra.mxu0 %v499
        %517 = vmatprep.subr.bf16.mxu0 0
        %518 = vmatpush1.bf16.xpose.msra.mxu0 0
        %519 = vmatprep.subr.bf16.mxu0 0
        %520 = vmatpush1.bf16.xpose.msra.mxu0 0
        %521 = vmatprep.subr.bf16.mxu0 0
        %522 = vmatpush1.bf16.xpose.msra.mxu0 0
        %523 = vmatprep.subr.bf16.mxu0 0
        %524 = vmatpush1.bf16.xpose.msra.mxu0 0
        %525 = vmatprep.subr.bf16.mxu0 0
        %526 = vmatpush1.bf16.xpose.msra.mxu0 0
        %527 = vmatprep.subr.bf16.mxu0 0
        %528 = vmatpush1.bf16.xpose.msra.mxu0 0
        %529 = vmatprep.subr.bf16.mxu0 0
        %530 = vmatpush1.bf16.xpose.msra.mxu0 0
        %531 = vmatprep.subr.bf16.mxu0 0
        %532 = vmatpush1.bf16.xpose.msra.mxu0 0
        %533 = vmatprep.mubr.bf16.mxu0 0
        %534 = vmatmul.mubr.bf16.gmra.mrb[0].mxu0 %v472
        %v535 = vpop.f32.mrb[0].mxu0
        %v536 = vadd.f32 %v443, %v535
        %v537 = vpop.f32.mrb[0].mxu0
        %v538 = vpop.f32.mrb[0].mxu0
        %v539 = vadd.f32 %v448, %v538
        %v540 = vpop.f32.mrb[0].mxu0
        %541 = vmatprep.mubr.bf16.mxu0 0
        %542 = vmatmul.mubr.bf16.gmra.mrb[0].mxu0 %v475
        %v543 = vpop.f32.mrb[0].mxu0
        %v544 = vadd.f32 %v453, %v543
        %v545 = vpop.f32.mrb[0].mxu0
        %v546 = vpop.f32.mrb[0].mxu0
        %v547 = vadd.f32 %v458, %v546
        %v548 = vpop.f32.mrb[0].mxu0
        %549 = vdwg.mxu0
        %v550 = vmax.f32 %v536, 0.0
        %v551 = vmax.f32 %v539, 0.0
        %v552 = vmax.f32 %v544, 0.0
        %v553 = vmax.f32 %v547, 0.0
        %v554 = vld [vmem:[%s3] sm:$0xf]
        %v555 = vld [vmem:[%s3 + $0x4] sm:$0xf]
        %v556 = vld [vmem:[%s4] sm:$0xff]
        %v557 = vld [vmem:[%s4 + $0x8] sm:$0xff]
        %v558 = vpack.c.bf16 %v551, %v550
        %v559 = vpack.c.bf16 %v553, %v552
        %561 = vset.pattern.permute.xlu0 0
        %562 = vperm.xlu0 %561, %v556
        %v563 = vpop.permute.xlu0 %562
        %566 = vset.pattern.permute.xlu0 0
        %567 = vperm.xlu0 %566, %v557
        %v568 = vpop.permute.xlu0 %567
        %v572 = vunpack.c.l.b16 %v554
        %v573 = vunpack.c.l.b16 %v555
        %v574 = vpack.c.b16 %v573, %v572
        %vm575 = vcmask 261120
        %v577 = vsel %vm575, %v574, 0
        %579 = vmatprep.subr.bf16.mxu0 0
        %580 = vmatpush1.bf16.msra.mxu0 %v558
        %581 = vmatprep.subr.bf16.mxu0 0
        %582 = vmatpush1.bf16.msra.mxu0 %v559
        %583 = vmatprep.subr.bf16.mxu0 0
        %584 = vmatpush1.bf16.msra.mxu0 0
        %585 = vmatprep.subr.bf16.mxu0 0
        %586 = vmatpush1.bf16.msra.mxu0 0
        %587 = vmatprep.subr.bf16.mxu0 0
        %588 = vmatpush1.bf16.msra.mxu0 0
        %589 = vmatprep.subr.bf16.mxu0 0
        %590 = vmatpush1.bf16.msra.mxu0 0
        %591 = vmatprep.subr.bf16.mxu0 0
        %592 = vmatpush1.bf16.msra.mxu0 0
        %593 = vmatprep.subr.bf16.mxu0 0
        %594 = vmatpush1.bf16.msra.mxu0 0
        %595 = vmatprep.subr.bf16.mxu0 0
        %596 = vmatpush1.bf16.msra.mxu0 0
        %597 = vmatprep.subr.bf16.mxu0 0
        %598 = vmatpush1.bf16.msra.mxu0 0
        %599 = vmatprep.subr.bf16.mxu0 0
        %600 = vmatpush1.bf16.msra.mxu0 0
        %601 = vmatprep.subr.bf16.mxu0 0
        %602 = vmatpush1.bf16.msra.mxu0 0
        %603 = vmatprep.subr.bf16.mxu0 0
        %604 = vmatpush1.bf16.msra.mxu0 0
        %605 = vmatprep.subr.bf16.mxu0 0
        %606 = vmatpush1.bf16.msra.mxu0 0
        %607 = vmatprep.subr.bf16.mxu0 0
        %608 = vmatpush1.bf16.msra.mxu0 0
        %609 = vmatprep.subr.bf16.mxu0 0
        %610 = vmatpush1.bf16.msra.mxu0 0
        %611 = vmatprep.mubr.bf16.mxu0 0
        %612 = vmatmul.mubr.bf16.gmra.mrb[0].mxu0 %v577
        %v613 = vpop.f32.mrb[0].mxu0
        %v614 = vadd.f32 %v563, %v613
        %v615 = vpop.f32.mrb[0].mxu0
        %v616 = vpop.f32.mrb[0].mxu0
        %v617 = vadd.f32 %v568, %v616
        %v618 = vpop.f32.mrb[0].mxu0
        %619 = vdwg.mxu0
        %v620 = vmax.f32 %v614, 0.0
        %v621 = vmax.f32 %v617, 0.0
        %v622 = vld [vmem:[%s5] sm:$0xf]
        %v623 = vld [vmem:[%s5 + $0x4] sm:$0xf]
        %v624 = vld [vmem:[%s6] sm:$0xff]
        %v625 = vld [vmem:[%s6 + $0x8] sm:$0xff]
        %v626 = vpack.c.bf16 %v621, %v620
        %628 = vset.pattern.permute.xlu0 0
        %629 = vperm.xlu0 %628, %v624
        %v630 = vpop.permute.xlu0 %629
        %633 = vset.pattern.permute.xlu0 0
        %634 = vperm.xlu0 %633, %v625
        %v635 = vpop.permute.xlu0 %634
        %v639 = vunpack.c.l.b16 %v622
        %v640 = vunpack.c.l.b16 %v623
        %v641 = vpack.c.b16 %v640, %v639
        %v643 = vsel %vm470, %v641, 0
        %645 = vmatprep.subr.bf16.mxu0 0
        %646 = vmatpush1.bf16.msra.mxu0 %v626
        %647 = vmatprep.subr.bf16.mxu0 0
        %648 = vmatpush1.bf16.msra.mxu0 0
        %649 = vmatprep.subr.bf16.mxu0 0
        %650 = vmatpush1.bf16.msra.mxu0 0
        %651 = vmatprep.subr.bf16.mxu0 0
        %652 = vmatpush1.bf16.msra.mxu0 0
        %653 = vmatprep.subr.bf16.mxu0 0
        %654 = vmatpush1.bf16.msra.mxu0 0
        %655 = vmatprep.subr.bf16.mxu0 0
        %656 = vmatpush1.bf16.msra.mxu0 0
        %657 = vmatprep.subr.bf16.mxu0 0
        %658 = vmatpush1.bf16.msra.mxu0 0
        %659 = vmatprep.subr.bf16.mxu0 0
        %660 = vmatpush1.bf16.msra.mxu0 0
        %661 = vmatprep.subr.bf16.mxu0 0
        %662 = vmatpush1.bf16.msra.mxu0 0
        %663 = vmatprep.subr.bf16.mxu0 0
        %664 = vmatpush1.bf16.msra.mxu0 0
        %665 = vmatprep.subr.bf16.mxu0 0
        %666 = vmatpush1.bf16.msra.mxu0 0
        %667 = vmatprep.subr.bf16.mxu0 0
        %668 = vmatpush1.bf16.msra.mxu0 0
        %669 = vmatprep.subr.bf16.mxu0 0
        %670 = vmatpush1.bf16.msra.mxu0 0
        %671 = vmatprep.subr.bf16.mxu0 0
        %672 = vmatpush1.bf16.msra.mxu0 0
        %673 = vmatprep.subr.bf16.mxu0 0
        %674 = vmatpush1.bf16.msra.mxu0 0
        %675 = vmatprep.subr.bf16.mxu0 0
        %676 = vmatpush1.bf16.msra.mxu0 0
        %677 = vmatprep.mubr.bf16.mxu0 0
        %678 = vmatmul.mubr.bf16.gmra.mrb[0].mxu0 %v643
        %v679 = vpop.f32.mrb[0].mxu0
        %v680 = vadd.f32 %v630, %v679
        %v681 = vpop.f32.mrb[0].mxu0
        %v682 = vpop.f32.mrb[0].mxu0
        %v683 = vadd.f32 %v635, %v682
        %v684 = vpop.f32.mrb[0].mxu0
        %685 = vdwg.mxu0
        %v686 = vmax.f32 %v680, 0.0
        %v687 = vmax.f32 %v683, 0.0
        %v688 = vld [vmem:[%s7] sm:$0xf]
        %v689 = vld [vmem:[%s7 + $0x4] sm:$0xf]
        %v690 = vld [vmem:[%s7 + $0x8] sm:$0xf]
        %v691 = vld [vmem:[%s7 + $0xc] sm:$0xf]
        %v692 = vld [vmem:[%s8] sm:$0xff]
        %v693 = vld [vmem:[%s8 + $0x8] sm:$0xff]
        %v694 = vld [vmem:[%s8 + $0x10] sm:$0xff]
        %v695 = vld [vmem:[%s8 + $0x18] sm:$0xff]
        %v696 = vpack.c.bf16 %v687, %v686
        %698 = vset.pattern.permute.xlu0 0
        %699 = vperm.xlu0 %698, %v692
        %v700 = vpop.permute.xlu0 %699
        %703 = vset.pattern.permute.xlu0 0
        %704 = vperm.xlu0 %703, %v693
        %v705 = vpop.permute.xlu0 %704
        %708 = vset.pattern.permute.xlu0 0
        %709 = vperm.xlu0 %708, %v694
        %v710 = vpop.permute.xlu0 %709
        %713 = vset.pattern.permute.xlu0 0
        %714 = vperm.xlu0 %713, %v695
        %v715 = vpop.permute.xlu0 %714
        %v721 = vunpack.c.l.b16 %v688
        %v722 = vunpack.c.l.b16 %v689
        %v723 = vunpack.c.l.b16 %v690
        %v724 = vunpack.c.l.b16 %v691
        %v725 = vpack.c.b16 %v722, %v721
        %v726 = vpack.c.b16 %v724, %v723
        %v728 = vsel %vm470, %v725, 0
        %v731 = vsel %vm470, %v726, 0
        %733 = vmatprep.subr.bf16.mxu0 0
        %734 = vmatpush1.bf16.msra.mxu0 %v696
        %735 = vmatprep.subr.bf16.mxu0 0
        %736 = vmatpush1.bf16.msra.mxu0 0
        %737 = vmatprep.subr.bf16.mxu0 0
        %738 = vmatpush1.bf16.msra.mxu0 0
        %739 = vmatprep.subr.bf16.mxu0 0
        %740 = vmatpush1.bf16.msra.mxu0 0
        %741 = vmatprep.subr.bf16.mxu0 0
        %742 = vmatpush1.bf16.msra.mxu0 0
        %743 = vmatprep.subr.bf16.mxu0 0
        %744 = vmatpush1.bf16.msra.mxu0 0
        %745 = vmatprep.subr.bf16.mxu0 0
        %746 = vmatpush1.bf16.msra.mxu0 0
        %747 = vmatprep.subr.bf16.mxu0 0
        %748 = vmatpush1.bf16.msra.mxu0 0
        %749 = vmatprep.subr.bf16.mxu0 0
        %750 = vmatpush1.bf16.msra.mxu0 0
        %751 = vmatprep.subr.bf16.mxu0 0
        %752 = vmatpush1.bf16.msra.mxu0 0
        %753 = vmatprep.subr.bf16.mxu0 0
        %754 = vmatpush1.bf16.msra.mxu0 0
        %755 = vmatprep.subr.bf16.mxu0 0
        %756 = vmatpush1.bf16.msra.mxu0 0
        %757 = vmatprep.subr.bf16.mxu0 0
        %758 = vmatpush1.bf16.msra.mxu0 0
        %759 = vmatprep.subr.bf16.mxu0 0
        %760 = vmatpush1.bf16.msra.mxu0 0
        %761 = vmatprep.subr.bf16.mxu0 0
        %762 = vmatpush1.bf16.msra.mxu0 0
        %763 = vmatprep.subr.bf16.mxu0 0
        %764 = vmatpush1.bf16.msra.mxu0 0
        %765 = vmatprep.mubr.bf16.mxu0 0
        %766 = vmatmul.mubr.bf16.gmra.mrb[0].mxu0 %v728
        %v767 = vpop.f32.mrb[0].mxu0
        %v768 = vadd.f32 %v700, %v767
        %v769 = vpop.f32.mrb[0].mxu0
        %v770 = vpop.f32.mrb[0].mxu0
        %v771 = vadd.f32 %v705, %v770
        %v772 = vpop.f32.mrb[0].mxu0
        %773 = vmatprep.mubr.bf16.mxu0 0
        %774 = vmatmul.mubr.bf16.gmra.mrb[0].mxu0 %v731
        %v775 = vpop.f32.mrb[0].mxu0
        %v776 = vadd.f32 %v710, %v775
        %v777 = vpop.f32.mrb[0].mxu0
        %v778 = vpop.f32.mrb[0].mxu0
        %v779 = vadd.f32 %v715, %v778
        %v780 = vpop.f32.mrb[0].mxu0
        %781 = vdwg.mxu0
        %v782 = vmax.f32 %v768, 0.0
        %v783 = vmax.f32 %v771, 0.0
        %v784 = vmax.f32 %v776, 0.0
        %v785 = vmax.f32 %v779, 0.0
        %v786 = vld [vmem:[%s9] sm:$0xf]
        %v787 = vld [vmem:[%s9 + $0x4] sm:$0xf]
        %v788 = vld [vmem:[%s10] sm:$0xff]
        %v789 = vld [vmem:[%s10 + $0x8] sm:$0xff]
        %v790 = vpack.c.bf16 %v783, %v782
        %v791 = vpack.c.bf16 %v785, %v784
        %793 = vset.pattern.permute.xlu0 0
        %794 = vperm.xlu0 %793, %v788
        %v795 = vpop.permute.xlu0 %794
        %798 = vset.pattern.permute.xlu0 0
        %799 = vperm.xlu0 %798, %v789
        %v800 = vpop.permute.xlu0 %799
        %v804 = vunpack.c.l.b16 %v786
        %v805 = vunpack.c.l.b16 %v787
        %v806 = vpack.c.b16 %v805, %v804
        %v808 = vsel %vm575, %v806, 0
        %810 = vmatprep.subr.bf16.mxu0 0
        %811 = vmatpush1.bf16.msra.mxu0 %v790
        %812 = vmatprep.subr.bf16.mxu0 0
        %813 = vmatpush1.bf16.msra.mxu0 %v791
        %814 = vmatprep.subr.bf16.mxu0 0
        %815 = vmatpush1.bf16.msra.mxu0 0
        %816 = vmatprep.subr.bf16.mxu0 0
        %817 = vmatpush1.bf16.msra.mxu0 0
        %818 = vmatprep.subr.bf16.mxu0 0
        %819 = vmatpush1.bf16.msra.mxu0 0
        %820 = vmatprep.subr.bf16.mxu0 0
        %821 = vmatpush1.bf16.msra.mxu0 0
        %822 = vmatprep.subr.bf16.mxu0 0
        %823 = vmatpush1.bf16.msra.mxu0 0
        %824 = vmatprep.subr.bf16.mxu0 0
        %825 = vmatpush1.bf16.msra.mxu0 0
        %826 = vmatprep.subr.bf16.mxu0 0
        %827 = vmatpush1.bf16.msra.mxu0 0
        %828 = vmatprep.subr.bf16.mxu0 0
        %829 = vmatpush1.bf16.msra.mxu0 0
        %830 = vmatprep.subr.bf16.mxu0 0
        %831 = vmatpush1.bf16.msra.mxu0 0
        %832 = vmatprep.subr.bf16.mxu0 0
        %833 = vmatpush1.bf16.msra.mxu0 0
        %834 = vmatprep.subr.bf16.mxu0 0
        %835 = vmatpush1.bf16.msra.mxu0 0
        %836 = vmatprep.subr.bf16.mxu0 0
        %837 = vmatpush1.bf16.msra.mxu0 0
        %838 = vmatprep.subr.bf16.mxu0 0
        %839 = vmatpush1.bf16.msra.mxu0 0
        %840 = vmatprep.subr.bf16.mxu0 0
        %841 = vmatpush1.bf16.msra.mxu0 0
        %842 = vmatprep.mubr.bf16.mxu0 0
        %843 = vmatmul.mubr.bf16.gmra.mrb[0].mxu0 %v808
        %v844 = vpop.f32.mrb[0].mxu0
        %v845 = vadd.f32 %v795, %v844
        %v846 = vpop.f32.mrb[0].mxu0
        %v847 = vpop.f32.mrb[0].mxu0
        %v848 = vadd.f32 %v800, %v847
        %v849 = vpop.f32.mrb[0].mxu0
        %850 = vdwg.mxu0
        %851 = vst [vmem:[%s392] sm:$0xff] %v845
        %852 = vst [vmem:[%s392 + $0x8] sm:$0xff] %v848
        %s853 = sand.u32 %s269, 1
        %s854 = scalar_lea.sflag [#allocation3], %s853
        %s855 = sand.u32 %s269, 1
        %s856 = smul.addr %s855, 16
        %s857 = scalar_lea.vmem [#allocation2], %s856
        // Predicated region
        $region65: #{_lambda_.1} parent=63 // pred_check
          %p858 = pneg %p279
        $region66: #{_lambda_.1} parent=63 // pred_check_branch
          %860 = sbr.rel (%p858) target = $region68
        $region67: #{_lambda_.1} parent=63 // pred_region
          %s862 = ssub.s32 256, 256
          %863 = vsyncadd %s854, %s862
          %s864 = smul.addr %s25, 128
          %s865 = scalar_lea.hbm %s11, %s864
          %s866 = sshll.u32 %s857, 4
          %s867 = int_to_ptr.vmem [resolvable:$true] %s866
          %872 = dma.vmem_to_hbm [thread:$0]  %s867, 256, %s865, %s854, 128, 256, 8
        $region68: #{_lambda_.1} parent=63 // pred_fallthru
          _
      $region64: #{_lambda_.1} parent=5 // pred_fallthru
        _
      %p873 = scmp.le.s32.totalorder 2, %s20
      // Predicated region
      $region69: #{_lambda_.1} parent=5 // pred_check
        %p874 = pneg %p873
      $region70: #{_lambda_.1} parent=5 // pred_check_branch
        %876 = sbr.rel (%p874) target = $region72
      $region71: #{_lambda_.1} parent=5 // pred_region
        %s877 = ssub.s32 %s20, 2
        // Predicated region
        $region73: #{_lambda_.1} parent=71 // pred_check
          %p878 = pneg %p285
        $region74: #{_lambda_.1} parent=71 // pred_check_branch
          %880 = sbr.rel (%p878) target = $region76
        $region75: #{_lambda_.1} parent=71 // pred_region
          %s881 = sand.u32 %s270, 1
          %s882 = scalar_lea.sflag [#allocation3], %s881
          %s883 = sand.u32 %s270, 1
          %s884 = smul.addr %s883, 16
          %s885 = scalar_lea.vmem [#allocation2], %s884
          %886 = dma.done %s882, 256
        $region76: #{_lambda_.1} parent=71 // pred_fallthru
          _
      $region72: #{_lambda_.1} parent=5 // pred_fallthru
        _
    $region6: #{_lambda_.1} parent=1 // loop_footer
      %s24 = sadd.s32 1, %s20
    $region7: #{_lambda_.1} parent=1 // loop_footer_branch
      %19 = sbr.rel target = $region3
    $region8: #{_lambda_.1} parent=1 // loop_exit
      _
    %887 = vsyncpa [#allocation3], 1
    %s888 = scalar_lea.sflag [#allocation3], 1
    %889 = vsyncpa %s888, 1

</llo_original>
